<compile_context>
chip_gen: v6e
topology: v6e:2x2x1
jax: 0.10.0
libtpu: 0.0.40
codegen_flags: <defaults>
</compile_context>

<pallas_src>
import functools

import jax
import jax.numpy as jnp
from jax import lax
from jax.experimental import pallas as pl
from jax.experimental.pallas import tpu as pltpu


# ---------------------------------------------------------------------------
# Fused Pallas kernel: 2-layer GCN encoder + inner-product BCE decoder
# ---------------------------------------------------------------------------
def _gae_fused_kernel(a_ref, x_ref, w1_ref, w2_ref, idx_ref, wsp_ref, wlin_ref,
                      loss_ref):
    f32 = jnp.float32
    bf16 = jnp.bfloat16

    a = a_ref[...]                                             # [Np, Np] bf16

    # ---- encoder layer 1: H1 = relu(A_hat @ (X @ W1)) ----
    xw1 = jnp.dot(x_ref[...], w1_ref[...],
                  preferred_element_type=f32).astype(bf16)     # [Np, Hp]
    h1 = jnp.maximum(jnp.dot(a, xw1, preferred_element_type=f32),
                     0.0).astype(bf16)                         # [Np, Hp]

    # ---- encoder layer 2: Z = A_hat @ (H1 @ W2) ----
    hw2 = jnp.dot(h1, w2_ref[...], preferred_element_type=f32).astype(bf16)
    zb = jnp.dot(a, hw2, preferred_element_type=f32).astype(bf16)  # [Np, Dp]

    # ---- decoder: endpoint gather via in-kernel one-hot + ONE matmul ----
    idx = idx_ref[...]                                         # [2*Ep, 1] i32
    e2 = idx.shape[0]
    n_pad = zb.shape[0]
    sel = (lax.broadcasted_iota(jnp.int32, (e2, n_pad), 1) == idx).astype(bf16)
    ze = jnp.dot(sel, zb, preferred_element_type=f32)          # [2*Ep, Dp]
    ep = e2 // 2
    z_src = ze[:ep]                                            # [Ep, Dp]
    z_dst = ze[ep:]                                            # [Ep, Dp]
    s = jnp.sum(z_src * z_dst, axis=-1, keepdims=True)         # [Ep, 1] f32

    # Stable BCE with pre-folded masks / means:
    #   mean_pos softplus(-s) + mean_neg softplus(s)
    #     = sum_e wsp_e * softplus(s_e) + wlin_e * s_e
    # (softplus(-s) = softplus(s) - s)
    # TODO(synk): for very large E, restructure the epilogue lane-dense
    # instead of this [Ep, 1] column.
    sp = jnp.maximum(s, 0.0) + jnp.log(1.0 + jnp.exp(-jnp.abs(s)))
    loss_ref[0, 0] = jnp.sum(wsp_ref[...] * sp + wlin_ref[...] * s)


def _vmem_limit_bytes():
    """Per-generation scoped-VMEM limit with headroom (v7x has only 64 MiB)."""
    try:
        cap = int(pltpu.get_tpu_info().vmem_capacity_bytes)
        return max(32 * 1024 * 1024, min(int(cap * 0.75), 100 * 1024 * 1024))
    except Exception:  # emulator / unknown chip
        return 64 * 1024 * 1024


def gae_fused_loss(a_hat_p, x_p, w1_p, w2_p, idx_all, w_sp, w_lin):
    n_pad = a_hat_p.shape[0]
    f_pad = x_p.shape[1]
    h_pad = w1_p.shape[1]
    d_pad = w2_p.shape[1]
    e2 = idx_all.shape[0]
    e_pad = e2 // 2

    vmem = pl.BlockSpec(memory_space=pltpu.MemorySpace.VMEM)
    smem = pl.BlockSpec(memory_space=pltpu.MemorySpace.SMEM)

    flops = 2 * (n_pad * f_pad * h_pad + n_pad * n_pad * h_pad
                 + n_pad * h_pad * d_pad + n_pad * n_pad * d_pad
                 + e2 * n_pad * d_pad) + 3 * e_pad * d_pad
    bytes_accessed = (2 * (n_pad * n_pad + n_pad * f_pad + f_pad * h_pad
                           + h_pad * d_pad)
                      + 4 * (e2 + 2 * e_pad) + 4)

    loss = pl.pallas_call(
        _gae_fused_kernel,
        out_shape=jax.ShapeDtypeStruct((1, 1), jnp.float32),
        in_specs=[vmem] * 7,
        out_specs=smem,
        compiler_params=pltpu.CompilerParams(
            vmem_limit_bytes=_vmem_limit_bytes()),
        cost_estimate=pl.CostEstimate(
            flops=flops, transcendentals=2 * e_pad,
            bytes_accessed=bytes_accessed),
    )(a_hat_p, x_p, w1_p, w2_p, idx_all, w_sp, w_lin)
    return loss[0, 0]


# ---------------------------------------------------------------------------
# Plain-JAX glue: adjacency normalization, negative sampling, padding
# ---------------------------------------------------------------------------
def _round_up(v, m):
    return ((v + m - 1) // m) * m


def _pad_cast_2d(a, rows, cols, dtype=jnp.bfloat16):
    """Zero-pad and cast in one shot (no separate pad + astype HBM passes)."""
    out = jnp.zeros((rows, cols), dtype)
    return lax.dynamic_update_slice(out, a.astype(dtype), (0, 0))


def normalized_adjacency_padded(edge_index, num_nodes, n_pad):
    """A_hat = D^{-1/2}(A + I)D^{-1/2}, built directly into its padded buffer."""
    src, dst = edge_index
    adj = jnp.zeros((n_pad, n_pad), jnp.float32)
    adj = adj.at[src, dst].set(1.0)
    diag = jnp.arange(num_nodes, dtype=jnp.int32)
    adj = adj.at[diag, diag].add(1.0)              # + I on real nodes only
    deg = jnp.sum(adj, axis=1)
    d_inv_sqrt = 1.0 / jnp.sqrt(jnp.maximum(deg, 1.0))
    return (adj * d_inv_sqrt[:, None] * d_inv_sqrt[None, :]).astype(jnp.bfloat16)


def negative_sampling(key, edge_index, batch, nodes_per_graph):
    """Per-batch random negative edges (same count as positives).

    # TODO(synk): exact PyG batched_negative_sampling rejects existing edges;
    # here we only enforce same-graph, non-self endpoints.
    """
    src = edge_index[0]
    e = src.shape[0]
    g_of_edge = batch[src]                       # graph id of each pos edge
    k1, k2 = jax.random.split(key)
    neg_src_local = jax.random.randint(k1, (e,), 0, nodes_per_graph)
    offset = jax.random.randint(k2, (e,), 1, nodes_per_graph)
    neg_dst_local = (neg_src_local + offset) % nodes_per_graph   # != src
    base = g_of_edge * nodes_per_graph
    return jnp.stack([base + neg_src_local, base + neg_dst_local], axis=0)


@functools.partial(jax.jit, static_argnames=("nodes_per_graph",))
def gae_forward(x, edge_index, batch, params, neg_key, *, nodes_per_graph):
    num_nodes = x.shape[0]
    f_in = x.shape[1]
    hidden = params["w1"].shape[1]
    d_out = params["w2"].shape[1]

    # Lane (last) dims padded to 128; node dim (sublane / small contraction)
    # only to the bf16 sublane tile to avoid pure-padding MXU/VMEM work.
    n_pad = _round_up(num_nodes, 16)
    f_pad = _round_up(f_in, 128)
    h_pad = _round_up(hidden, 128)
    d_pad = _round_up(d_out, 128)

    a_hat_p = normalized_adjacency_padded(edge_index, num_nodes, n_pad)
    x_p = _pad_cast_2d(x, n_pad, f_pad)
    w1_p = _pad_cast_2d(params["w1"], f_pad, h_pad)
    w2_p = _pad_cast_2d(params["w2"], h_pad, d_pad)

    # negative sampling (no_grad random op -> plain JAX glue)
    neg_edge_index = negative_sampling(neg_key, edge_index, batch,
                                       nodes_per_graph)

    num_pos = edge_index.shape[1]
    num_neg = neg_edge_index.shape[1]
    num_e = num_pos + num_neg
    e_pad = _round_up(num_e, 8)      # 2*e_pad rows -> bf16 sublane multiple

    src_all = jnp.concatenate([edge_index[0], neg_edge_index[0]]).astype(jnp.int32)
    dst_all = jnp.concatenate([edge_index[1], neg_edge_index[1]]).astype(jnp.int32)
    pad = e_pad - num_e
    if pad:
        src_all = jnp.pad(src_all, (0, pad), constant_values=-1)
        dst_all = jnp.pad(dst_all, (0, pad), constant_values=-1)
    # src rows then dst rows: a tiny [2*E_pad, 1] i32 column (replaces the old
    # [2*E_pad, N_pad] one-hot slabs that went through HBM).
    idx_all = jnp.concatenate([src_all, dst_all])[:, None]

    # Pre-folded BCE weights: loss = sum_e wsp_e*softplus(s_e) + wlin_e*s_e.
    e_ids = jnp.arange(e_pad)
    is_pos = e_ids < num_pos
    is_neg = (e_ids >= num_pos) & (e_ids < num_e)
    w_sp = jnp.where(is_pos, 1.0 / num_pos,
                     jnp.where(is_neg, 1.0 / num_neg, 0.0))
    w_lin = jnp.where(is_pos, -1.0 / num_pos, 0.0)
    w_sp = w_sp.astype(jnp.float32)[:, None]
    w_lin = w_lin.astype(jnp.float32)[:, None]

    return gae_fused_loss(a_hat_p, x_p, w1_p, w2_p, idx_all, w_sp, w_lin)


# ---------------------------------------------------------------------------
# main
# ---------------------------------------------------------------------------
if __name__ == "__main__":
    key = jax.random.PRNGKey(0)
    k_x, k_w1, k_w2, k_neg = jax.random.split(key, 4)

    num_graphs = 2
    nodes_per_graph = 16
    num_nodes = num_graphs * nodes_per_graph      # 32
    f_in, hidden, d_out = 16, 32, 32

    # node features and batch assignment
    x = jax.random.normal(k_x, (num_nodes, f_in), jnp.float32)
    batch = jnp.repeat(jnp.arange(num_graphs, dtype=jnp.int32), nodes_per_graph)

    # positive edges: a bidirectional ring inside each graph
    src_list, dst_list = [], []
    for g in range(num_graphs):
        base = g * nodes_per_graph
        for i in range(nodes_per_graph):
            j = (i + 1) % nodes_per_graph
            src_list += [base + i, base + j]
            dst_list += [base + j, base + i]
    edge_index = jnp.array([src_list, dst_list], dtype=jnp.int32)  # [2, 64]

    # deterministic GCN weights (Glorot-ish scaling)
    params = {
        "w1": jax.random.normal(k_w1, (f_in, hidden), jnp.float32)
        * (1.0 / jnp.sqrt(f_in)),
        "w2": jax.random.normal(k_w2, (hidden, d_out), jnp.float32)
        * (1.0 / jnp.sqrt(hidden)),
    }

    loss = gae_forward(x, edge_index, batch, params, k_neg,
                       nodes_per_graph=nodes_per_graph)
    loss = jax.block_until_ready(loss)
    assert jnp.isfinite(loss)
    print("KERNEL_OK")
</pallas_src>

<mosaic_0001>
module attributes {stable_mosaic.version = 11 : i64} {
  func.func private @main(%arg0: i32) attributes {dimension_semantics = [#tpu.dimension_semantics<core_parallel>], iteration_bounds = array<i64: 2>, tpu.core_type = #tpu.core_type<sc_scalar_subcore>, window_params = []} {
    return
  }
}

module attributes {stable_mosaic.version = 11 : i64} {
  func.func private @main(%arg0: i32) attributes {dimension_semantics = [#tpu.dimension_semantics<core_parallel>], iteration_bounds = array<i64: 2>, tpu.core_type = #tpu.core_type<sc_scalar_subcore>, window_params = []} {
    return
  }
}

module attributes {stable_mosaic.version = 11 : i64} {
  func.func @_gae_fused_kernel(%arg0: memref<32x32xbf16, #tpu.memory_space<vmem>>, %arg1: memref<32x128xbf16, #tpu.memory_space<vmem>>, %arg2: memref<128x128xbf16, #tpu.memory_space<vmem>>, %arg3: memref<128x128xbf16, #tpu.memory_space<vmem>>, %arg4: memref<256x1xi32, #tpu.memory_space<vmem>>, %arg5: memref<128x1xf32, #tpu.memory_space<vmem>>, %arg6: memref<128x1xf32, #tpu.memory_space<vmem>>, %arg7: memref<1x1xf32, #tpu.memory_space<smem>>) attributes {dimension_semantics = [], scalar_prefetch = 0 : i64, scratch_operands = 0 : i64, tpu.core_type = #tpu.core_type<tc>} {
    %c0 = arith.constant 0 : index
    %c0_0 = arith.constant 0 : index
    %0 = vector.load %arg0[%c0, %c0_0] : memref<32x32xbf16, #tpu.memory_space<vmem>>, vector<32x32xbf16>
    %c0_1 = arith.constant 0 : index
    %c0_2 = arith.constant 0 : index
    %1 = vector.load %arg1[%c0_1, %c0_2] : memref<32x128xbf16, #tpu.memory_space<vmem>>, vector<32x128xbf16>
    %c0_3 = arith.constant 0 : index
    %c0_4 = arith.constant 0 : index
    %2 = vector.load %arg2[%c0_3, %c0_4] : memref<128x128xbf16, #tpu.memory_space<vmem>>, vector<128x128xbf16>
    %cst = arith.constant dense<0.000000e+00> : vector<32x128xf32>
    %3 = tpu.matmul %1, %2, %cst {dimension_numbers = #tpu.dot_dimension_numbers<[1], [0], [0], [1], [0, 0, 1, 1], [], []>} : vector<32x128xbf16>, vector<128x128xbf16>, vector<32x128xf32> -> vector<32x128xf32>
    %4 = arith.truncf %3 : vector<32x128xf32> to vector<32x128xbf16>
    %cst_5 = arith.constant dense<0.000000e+00> : vector<32x128xf32>
    %5 = tpu.matmul %0, %4, %cst_5 {dimension_numbers = #tpu.dot_dimension_numbers<[1], [0], [0], [1], [0, 0, 1, 1], [], []>} : vector<32x32xbf16>, vector<32x128xbf16>, vector<32x128xf32> -> vector<32x128xf32>
    %cst_6 = arith.constant 0.000000e+00 : f32
    %6 = vector.broadcast %cst_6 : f32 to vector<32x128xf32>
    %7 = arith.maximumf %5, %6 : vector<32x128xf32>
    %8 = arith.truncf %7 : vector<32x128xf32> to vector<32x128xbf16>
    %c0_7 = arith.constant 0 : index
    %c0_8 = arith.constant 0 : index
    %9 = vector.load %arg3[%c0_7, %c0_8] : memref<128x128xbf16, #tpu.memory_space<vmem>>, vector<128x128xbf16>
    %cst_9 = arith.constant dense<0.000000e+00> : vector<32x128xf32>
    %10 = tpu.matmul %8, %9, %cst_9 {dimension_numbers = #tpu.dot_dimension_numbers<[1], [0], [0], [1], [0, 0, 1, 1], [], []>} : vector<32x128xbf16>, vector<128x128xbf16>, vector<32x128xf32> -> vector<32x128xf32>
    %11 = arith.truncf %10 : vector<32x128xf32> to vector<32x128xbf16>
    %cst_10 = arith.constant dense<0.000000e+00> : vector<32x128xf32>
    %12 = tpu.matmul %0, %11, %cst_10 {dimension_numbers = #tpu.dot_dimension_numbers<[1], [0], [0], [1], [0, 0, 1, 1], [], []>} : vector<32x32xbf16>, vector<32x128xbf16>, vector<32x128xf32> -> vector<32x128xf32>
    %13 = arith.truncf %12 : vector<32x128xf32> to vector<32x128xbf16>
    %c0_11 = arith.constant 0 : index
    %c0_12 = arith.constant 0 : index
    %14 = vector.load %arg4[%c0_11, %c0_12] : memref<256x1xi32, #tpu.memory_space<vmem>>, vector<256x1xi32>
    %15 = tpu.iota {dimensions = array<i32: 1>} : vector<256x32xi32>
    %16 = vector.broadcast %14 : vector<256x1xi32> to vector<256x32xi32>
    %17 = arith.cmpi eq, %15, %16 : vector<256x32xi32>
    %18 = arith.extui %17 : vector<256x32xi1> to vector<256x32xi32>
    %19 = arith.sitofp %18 : vector<256x32xi32> to vector<256x32xf32>
    %20 = arith.truncf %19 : vector<256x32xf32> to vector<256x32xbf16>
    %cst_13 = arith.constant dense<0.000000e+00> : vector<256x128xf32>
    %21 = tpu.matmul %20, %13, %cst_13 {dimension_numbers = #tpu.dot_dimension_numbers<[1], [0], [0], [1], [0, 0, 1, 1], [], []>} : vector<256x32xbf16>, vector<32x128xbf16>, vector<256x128xf32> -> vector<256x128xf32>
    %22 = vector.extract_strided_slice %21 {offsets = [0, 0], sizes = [128, 128], strides = [1, 1]} : vector<256x128xf32> to vector<128x128xf32>
    %23 = vector.extract_strided_slice %21 {offsets = [128, 0], sizes = [128, 128], strides = [1, 1]} : vector<256x128xf32> to vector<128x128xf32>
    %24 = arith.mulf %22, %23 : vector<128x128xf32>
    %cst_14 = arith.constant dense<0.000000e+00> : vector<128xf32>
    %25 = vector.multi_reduction <add>, %24, %cst_14 [1] : vector<128x128xf32> to vector<128xf32>
    %26 = vector.shape_cast %25 : vector<128xf32> to vector<128x1xf32>
    %cst_15 = arith.constant 0.000000e+00 : f32
    %27 = vector.broadcast %cst_15 : f32 to vector<128x1xf32>
    %28 = arith.maximumf %26, %27 : vector<128x1xf32>
    %29 = math.absf %26 : vector<128x1xf32>
    %cst_16 = arith.constant 0.000000e+00 : f32
    %30 = vector.broadcast %cst_16 : f32 to vector<128x1xf32>
    %31 = arith.subf %30, %29 : vector<128x1xf32>
    %32 = math.exp %31 : vector<128x1xf32>
    %cst_17 = arith.constant 1.000000e+00 : f32
    %33 = vector.broadcast %cst_17 : f32 to vector<128x1xf32>
    %34 = arith.addf %33, %32 : vector<128x1xf32>
    %35 = math.log %34 : vector<128x1xf32>
    %36 = arith.addf %28, %35 : vector<128x1xf32>
    %c0_18 = arith.constant 0 : index
    %c0_19 = arith.constant 0 : index
    %37 = vector.load %arg5[%c0_18, %c0_19] : memref<128x1xf32, #tpu.memory_space<vmem>>, vector<128x1xf32>
    %38 = arith.mulf %37, %36 : vector<128x1xf32>
    %c0_20 = arith.constant 0 : index
    %c0_21 = arith.constant 0 : index
    %39 = vector.load %arg6[%c0_20, %c0_21] : memref<128x1xf32, #tpu.memory_space<vmem>>, vector<128x1xf32>
    %40 = arith.mulf %39, %26 : vector<128x1xf32>
    %41 = arith.addf %38, %40 : vector<128x1xf32>
    %42 = vector.shape_cast %41 : vector<128x1xf32> to vector<1x128x1xf32>
    %cst_22 = arith.constant dense<0.000000e+00> : vector<1xf32>
    %43 = vector.multi_reduction <add>, %42, %cst_22 [1, 2] : vector<1x128x1xf32> to vector<1xf32>
    %44 = vector.shape_cast %43 : vector<1xf32> to vector<1x1x1xf32>
    %45 = vector.extract %44[0, 0, 0] : f32 from vector<1x1x1xf32>
    %c0_23 = arith.constant 0 : index
    %c0_24 = arith.constant 0 : index
    %46 = memref.load %arg7[%c0_23, %c0_24] : memref<1x1xf32, #tpu.memory_space<smem>>
    memref.store %45, %arg7[%c0_23, %c0_24] : memref<1x1xf32, #tpu.memory_space<smem>>
    return
  }
}

</mosaic_0001>

<llo_original>
// kernel: gae_forward.1
$region0: #{gae_forward.1}
  #allocation0 [shape = 'u32[]', space=smem, size = 0x4, offset = 0x4, fixed_abs, tag = 'smem constant byte address 0x4 - core index']
  #allocation1 [shape = 'u32[144,128]{1,0:T(1,128)}', space=vmem, size = 0x12000, scoped, tag = 'internal scratch']
  %s0 = inlined_call_operand.vmem [shape: bf16[32,32], index: 0, kind: input, shape index: {}]
  %s1 = inlined_call_operand.vmem [shape: bf16[32,128], index: 1, kind: input, shape index: {}]
  %s2 = inlined_call_operand.vmem [shape: bf16[128,128], index: 2, kind: input, shape index: {}]
  %s3 = inlined_call_operand.vmem [shape: bf16[128,128], index: 3, kind: input, shape index: {}]
  %s4 = inlined_call_operand.vmem [shape: s32[256,1], index: 4, kind: input, shape index: {}]
  %s5 = inlined_call_operand.vmem [shape: f32[128,1], index: 5, kind: input, shape index: {}]
  %s6 = inlined_call_operand.vmem [shape: f32[128,1], index: 6, kind: input, shape index: {}]
  %s7 = inlined_call_operand.hbm [shape: f32[1,1], index: 7, kind: output, shape index: {}]
  %s8 = sld [smem:[#allocation0]]
  $region38: #{gae_forward.1} parent=0
    _
  %s10 = ssub.s32 1, %s8
  %s11 = scalar_select 0, %s10, %s8
  $region1: #{gae_forward.1} parent=0
    #allocation2 [shape = 'u8[512]{0}', space=smem, size = 0x200, scoped, tag = 'output window, operand 0, single buffered']
    #allocation3 [shape = 's32[1]{0}', space=sflag, size = 0x4, scoped, tag = 'scoped memory for gae_forward.1']
    %12 = vsyncpa [#allocation3], 0
    // Predicated region
    $region2: #{gae_forward.1} parent=1 // pred_check
      _
    $region3: #{gae_forward.1} parent=1 // pred_check_branch
      %14 = sbr.rel (0) target = $region5
    $region4: #{gae_forward.1} parent=1 // pred_region
      _
    $region5: #{gae_forward.1} parent=1 // pred_fallthru
      _
    // Predicated region
    $region6: #{gae_forward.1} parent=1 // pred_check
      _
    $region7: #{gae_forward.1} parent=1 // pred_check_branch
      %16 = sbr.rel (0) target = $region9
    $region8: #{gae_forward.1} parent=1 // pred_region
      _
    $region9: #{gae_forward.1} parent=1 // pred_fallthru
      _
    // Predicated region
    $region10: #{gae_forward.1} parent=1 // pred_check
      _
    $region11: #{gae_forward.1} parent=1 // pred_check_branch
      %18 = sbr.rel (0) target = $region13
    $region12: #{gae_forward.1} parent=1 // pred_region
      _
    $region13: #{gae_forward.1} parent=1 // pred_fallthru
      _
    // Predicated region
    $region14: #{gae_forward.1} parent=1 // pred_check
      _
    $region15: #{gae_forward.1} parent=1 // pred_check_branch
      %20 = sbr.rel (0) target = $region17
    $region16: #{gae_forward.1} parent=1 // pred_region
      _
    $region17: #{gae_forward.1} parent=1 // pred_fallthru
      _
    // Predicated region
    $region18: #{gae_forward.1} parent=1 // pred_check
      _
    $region19: #{gae_forward.1} parent=1 // pred_check_branch
      %22 = sbr.rel (0) target = $region21
    $region20: #{gae_forward.1} parent=1 // pred_region
      _
    $region21: #{gae_forward.1} parent=1 // pred_fallthru
      _
    // Predicated region
    $region22: #{gae_forward.1} parent=1 // pred_check
      _
    $region23: #{gae_forward.1} parent=1 // pred_check_branch
      %24 = sbr.rel (0) target = $region25
    $region24: #{gae_forward.1} parent=1 // pred_region
      _
    $region25: #{gae_forward.1} parent=1 // pred_fallthru
      _
    // Predicated region
    $region26: #{gae_forward.1} parent=1 // pred_check
      _
    $region27: #{gae_forward.1} parent=1 // pred_check_branch
      %26 = sbr.rel (0) target = $region29
    $region28: #{gae_forward.1} parent=1 // pred_region
      _
    $region29: #{gae_forward.1} parent=1 // pred_fallthru
      _
    %v28 = vld [vmem:[%s0] sm:$0xf]
    %v29 = vld [vmem:[%s0 + $0x4] sm:$0xf]
    %v30 = vld [vmem:[%s0 + $0x8] sm:$0xf]
    %v31 = vld [vmem:[%s0 + $0xc] sm:$0xf]
    %v32 = vld [vmem:[%s1] sm:$0xf]
    %v33 = vld [vmem:[%s1 + $0x4] sm:$0xf]
    %v34 = vld [vmem:[%s1 + $0x8] sm:$0xf]
    %v35 = vld [vmem:[%s1 + $0xc] sm:$0xf]
    %v36 = vld [vmem:[%s2] sm:$0xf]
    %v37 = vld [vmem:[%s2 + $0x4] sm:$0xf]
    %v38 = vld [vmem:[%s2 + $0x8] sm:$0xf]
    %v39 = vld [vmem:[%s2 + $0xc] sm:$0xf]
    %v40 = vld [vmem:[%s2 + $0x10] sm:$0xf]
    %v41 = vld [vmem:[%s2 + $0x14] sm:$0xf]
    %v42 = vld [vmem:[%s2 + $0x18] sm:$0xf]
    %v43 = vld [vmem:[%s2 + $0x1c] sm:$0xf]
    %v44 = vld [vmem:[%s2 + $0x20] sm:$0xf]
    %v45 = vld [vmem:[%s2 + $0x24] sm:$0xf]
    %v46 = vld [vmem:[%s2 + $0x28] sm:$0xf]
    %v47 = vld [vmem:[%s2 + $0x2c] sm:$0xf]
    %v48 = vld [vmem:[%s2 + $0x30] sm:$0xf]
    %v49 = vld [vmem:[%s2 + $0x34] sm:$0xf]
    %v50 = vld [vmem:[%s2 + $0x38] sm:$0xf]
    %v51 = vld [vmem:[%s2 + $0x3c] sm:$0xf]
    %v56 = vunpack.c.l.b16 %v32
    %v57 = vunpack.c.l.b16 %v33
    %v58 = vunpack.c.l.b16 %v34
    %v59 = vunpack.c.l.b16 %v35
    %v60 = vpack.c.b16 %v57, %v56
    %v61 = vpack.c.b16 %v59, %v58
    %v80 = vunpack.c.l.b16 %v36
    %v81 = vunpack.c.l.b16 %v37
    %v82 = vunpack.c.l.b16 %v38
    %v83 = vunpack.c.l.b16 %v39
    %v84 = vunpack.c.l.b16 %v40
    %v85 = vunpack.c.l.b16 %v41
    %v86 = vunpack.c.l.b16 %v42
    %v87 = vunpack.c.l.b16 %v43
    %v88 = vunpack.c.l.b16 %v44
    %v89 = vunpack.c.l.b16 %v45
    %v90 = vunpack.c.l.b16 %v46
    %v91 = vunpack.c.l.b16 %v47
    %v92 = vunpack.c.l.b16 %v48
    %v93 = vunpack.c.l.b16 %v49
    %v94 = vunpack.c.l.b16 %v50
    %v95 = vunpack.c.l.b16 %v51
    %v96 = vpack.c.b16 %v81, %v80
    %v97 = vpack.c.b16 %v83, %v82
    %v98 = vpack.c.b16 %v85, %v84
    %v99 = vpack.c.b16 %v87, %v86
    %v100 = vpack.c.b16 %v89, %v88
    %v101 = vpack.c.b16 %v91, %v90
    %v102 = vpack.c.b16 %v93, %v92
    %v103 = vpack.c.b16 %v95, %v94
    %112 = vmatprep.subr.bf16.mxu0 0
    %113 = vmatpush1.bf16.msra.mxu0 %v103
    %114 = vmatprep.subr.bf16.mxu0 0
    %115 = vmatpush1.bf16.msra.mxu0 %v102
    %116 = vmatprep.subr.bf16.mxu0 0
    %117 = vmatpush1.bf16.msra.mxu0 %v101
    %118 = vmatprep.subr.bf16.mxu0 0
    %119 = vmatpush1.bf16.msra.mxu0 %v100
    %120 = vmatprep.subr.bf16.mxu0 0
    %121 = vmatpush1.bf16.msra.mxu0 %v99
    %122 = vmatprep.subr.bf16.mxu0 0
    %123 = vmatpush1.bf16.msra.mxu0 %v98
    %124 = vmatprep.subr.bf16.mxu0 0
    %125 = vmatpush1.bf16.msra.mxu0 %v97
    %126 = vmatprep.subr.bf16.mxu0 0
    %127 = vmatpush1.bf16.msra.mxu0 %v96
    %128 = vmatprep.subr.bf16.mxu0 0
    %129 = vmatpush2.bf16.msra.mxu0 0
    %130 = vmatprep.subr.bf16.mxu0 0
    %131 = vmatpush2.bf16.msra.mxu0 0
    %132 = vmatprep.subr.bf16.mxu0 0
    %133 = vmatpush2.bf16.msra.mxu0 0
    %134 = vmatprep.subr.bf16.mxu0 0
    %135 = vmatpush2.bf16.msra.mxu0 0
    %136 = vmatprep.subr.bf16.mxu0 0
    %137 = vmatpush2.bf16.msra.mxu0 0
    %138 = vmatprep.subr.bf16.mxu0 0
    %139 = vmatpush2.bf16.msra.mxu0 0
    %140 = vmatprep.subr.bf16.mxu0 0
    %141 = vmatpush2.bf16.msra.mxu0 0
    %142 = vmatprep.subr.bf16.mxu0 0
    %143 = vmatpush2.bf16.msra.mxu0 0
    %144 = vmatprep.mubr.bf16.mxu0 0
    %145 = vmatmul.mubr.bf16.gmra.mxu0 %v60
    %v146 = vpop.f32.mrf.mxu0
    %v147 = vadd.f32 0.0, %v146
    %v148 = vpop.f32.mrf.mxu0
    %v149 = vpop.f32.mrf.mxu0
    %v150 = vadd.f32 0.0, %v149
    %v151 = vpop.f32.mrf.mxu0
    %152 = vmatprep.mubr.bf16.mxu0 0
    %153 = vmatmul.mubr.bf16.gmra.mxu0 %v61
    %v154 = vpop.f32.mrf.mxu0
    %v155 = vadd.f32 0.0, %v154
    %v156 = vpop.f32.mrf.mxu0
    %v157 = vpop.f32.mrf.mxu0
    %v158 = vadd.f32 0.0, %v157
    %v159 = vpop.f32.mrf.mxu0
    %160 = vdwg.mxu0
    %v161 = vpack.c.bf16 %v150, %v147
    %v162 = vpack.c.bf16 %v158, %v155
    %v167 = vunpack.c.l.b16 %v28
    %v168 = vunpack.c.l.b16 %v29
    %v169 = vunpack.c.l.b16 %v30
    %v170 = vunpack.c.l.b16 %v31
    %v171 = vpack.c.b16 %v168, %v167
    %v172 = vpack.c.b16 %v170, %v169
    %vm173 = vcmask 261120
    %v175 = vsel %vm173, %v171, 0
    %v178 = vsel %vm173, %v172, 0
    %180 = vmatprep.subr.bf16.mxu0 0
    %181 = vmatpush1.bf16.msra.mxu0 0
    %182 = vmatprep.subr.bf16.mxu0 0
    %183 = vmatpush1.bf16.msra.mxu0 0
    %184 = vmatprep.subr.bf16.mxu0 0
    %185 = vmatpush1.bf16.msra.mxu0 0
    %186 = vmatprep.subr.bf16.mxu0 0
    %187 = vmatpush1.bf16.msra.mxu0 0
    %188 = vmatprep.subr.bf16.mxu0 0
    %189 = vmatpush1.bf16.msra.mxu0 0
    %190 = vmatprep.subr.bf16.mxu0 0
    %191 = vmatpush1.bf16.msra.mxu0 0
    %192 = vmatprep.subr.bf16.mxu0 0
    %193 = vmatpush1.bf16.msra.mxu0 %v162
    %194 = vmatprep.subr.bf16.mxu0 0
    %195 = vmatpush1.bf16.msra.mxu0 %v161
    %196 = vmatprep.subr.bf16.mxu0 0
    %197 = vmatpush2.bf16.msra.mxu0 0
    %198 = vmatprep.subr.bf16.mxu0 0
    %199 = vmatpush2.bf16.msra.mxu0 0
    %200 = vmatprep.subr.bf16.mxu0 0
    %201 = vmatpush2.bf16.msra.mxu0 0
    %202 = vmatprep.subr.bf16.mxu0 0
    %203 = vmatpush2.bf16.msra.mxu0 0
    %204 = vmatprep.subr.bf16.mxu0 0
    %205 = vmatpush2.bf16.msra.mxu0 0
    %206 = vmatprep.subr.bf16.mxu0 0
    %207 = vmatpush2.bf16.msra.mxu0 0
    %208 = vmatprep.subr.bf16.mxu0 0
    %209 = vmatpush2.bf16.msra.mxu0 0
    %210 = vmatprep.subr.bf16.mxu0 0
    %211 = vmatpush2.bf16.msra.mxu0 0
    %212 = vmatprep.mubr.bf16.mxu0 0
    %213 = vmatmul.mubr.bf16.gmra.mxu0 %v175
    %v214 = vpop.f32.mrf.mxu0
    %v215 = vadd.f32 0.0, %v214
    %v216 = vpop.f32.mrf.mxu0
    %v217 = vpop.f32.mrf.mxu0
    %v218 = vadd.f32 0.0, %v217
    %v219 = vpop.f32.mrf.mxu0
    %220 = vmatprep.mubr.bf16.mxu0 0
    %221 = vmatmul.mubr.bf16.gmra.mxu0 %v178
    %v222 = vpop.f32.mrf.mxu0
    %v223 = vadd.f32 0.0, %v222
    %v224 = vpop.f32.mrf.mxu0
    %v225 = vpop.f32.mrf.mxu0
    %v226 = vadd.f32 0.0, %v225
    %v227 = vpop.f32.mrf.mxu0
    %228 = vdwg.mxu0
    %v229 = vmax.f32 %v215, 0.0
    %v230 = vmax.f32 %v218, 0.0
    %v231 = vmax.f32 %v223, 0.0
    %v232 = vmax.f32 %v226, 0.0
    %v233 = vpack.c.bf16 %v230, %v229
    %v234 = vpack.c.bf16 %v232, %v231
    %v235 = vld [vmem:[%s3] sm:$0xf]
    %v236 = vld [vmem:[%s3 + $0x4] sm:$0xf]
    %v237 = vld [vmem:[%s3 + $0x8] sm:$0xf]
    %v238 = vld [vmem:[%s3 + $0xc] sm:$0xf]
    %v239 = vld [vmem:[%s3 + $0x10] sm:$0xf]
    %v240 = vld [vmem:[%s3 + $0x14] sm:$0xf]
    %v241 = vld [vmem:[%s3 + $0x18] sm:$0xf]
    %v242 = vld [vmem:[%s3 + $0x1c] sm:$0xf]
    %v243 = vld [vmem:[%s3 + $0x20] sm:$0xf]
    %v244 = vld [vmem:[%s3 + $0x24] sm:$0xf]
    %v245 = vld [vmem:[%s3 + $0x28] sm:$0xf]
    %v246 = vld [vmem:[%s3 + $0x2c] sm:$0xf]
    %v247 = vld [vmem:[%s3 + $0x30] sm:$0xf]
    %v248 = vld [vmem:[%s3 + $0x34] sm:$0xf]
    %v249 = vld [vmem:[%s3 + $0x38] sm:$0xf]
    %v250 = vld [vmem:[%s3 + $0x3c] sm:$0xf]
    %v267 = vunpack.c.l.b16 %v235
    %v268 = vunpack.c.l.b16 %v236
    %v269 = vunpack.c.l.b16 %v237
    %v270 = vunpack.c.l.b16 %v238
    %v271 = vunpack.c.l.b16 %v239
    %v272 = vunpack.c.l.b16 %v240
    %v273 = vunpack.c.l.b16 %v241
    %v274 = vunpack.c.l.b16 %v242
    %v275 = vunpack.c.l.b16 %v243
    %v276 = vunpack.c.l.b16 %v244
    %v277 = vunpack.c.l.b16 %v245
    %v278 = vunpack.c.l.b16 %v246
    %v279 = vunpack.c.l.b16 %v247
    %v280 = vunpack.c.l.b16 %v248
    %v281 = vunpack.c.l.b16 %v249
    %v282 = vunpack.c.l.b16 %v250
    %v283 = vpack.c.b16 %v268, %v267
    %v284 = vpack.c.b16 %v270, %v269
    %v285 = vpack.c.b16 %v272, %v271
    %v286 = vpack.c.b16 %v274, %v273
    %v287 = vpack.c.b16 %v276, %v275
    %v288 = vpack.c.b16 %v278, %v277
    %v289 = vpack.c.b16 %v280, %v279
    %v290 = vpack.c.b16 %v282, %v281
    %299 = vmatprep.subr.bf16.mxu0 0
    %300 = vmatpush1.bf16.msra.mxu0 %v290
    %301 = vmatprep.subr.bf16.mxu0 0
    %302 = vmatpush1.bf16.msra.mxu0 %v289
    %303 = vmatprep.subr.bf16.mxu0 0
    %304 = vmatpush1.bf16.msra.mxu0 %v288
    %305 = vmatprep.subr.bf16.mxu0 0
    %306 = vmatpush1.bf16.msra.mxu0 %v287
    %307 = vmatprep.subr.bf16.mxu0 0
    %308 = vmatpush1.bf16.msra.mxu0 %v286
    %309 = vmatprep.subr.bf16.mxu0 0
    %310 = vmatpush1.bf16.msra.mxu0 %v285
    %311 = vmatprep.subr.bf16.mxu0 0
    %312 = vmatpush1.bf16.msra.mxu0 %v284
    %313 = vmatprep.subr.bf16.mxu0 0
    %314 = vmatpush1.bf16.msra.mxu0 %v283
    %315 = vmatprep.subr.bf16.mxu0 0
    %316 = vmatpush2.bf16.msra.mxu0 0
    %317 = vmatprep.subr.bf16.mxu0 0
    %318 = vmatpush2.bf16.msra.mxu0 0
    %319 = vmatprep.subr.bf16.mxu0 0
    %320 = vmatpush2.bf16.msra.mxu0 0
    %321 = vmatprep.subr.bf16.mxu0 0
    %322 = vmatpush2.bf16.msra.mxu0 0
    %323 = vmatprep.subr.bf16.mxu0 0
    %324 = vmatpush2.bf16.msra.mxu0 0
    %325 = vmatprep.subr.bf16.mxu0 0
    %326 = vmatpush2.bf16.msra.mxu0 0
    %327 = vmatprep.subr.bf16.mxu0 0
    %328 = vmatpush2.bf16.msra.mxu0 0
    %329 = vmatprep.subr.bf16.mxu0 0
    %330 = vmatpush2.bf16.msra.mxu0 0
    %331 = vmatprep.mubr.bf16.mxu0 0
    %332 = vmatmul.mubr.bf16.gmra.mxu0 %v233
    %v333 = vpop.f32.mrf.mxu0
    %v334 = vadd.f32 0.0, %v333
    %v335 = vpop.f32.mrf.mxu0
    %v336 = vpop.f32.mrf.mxu0
    %v337 = vadd.f32 0.0, %v336
    %v338 = vpop.f32.mrf.mxu0
    %339 = vmatprep.mubr.bf16.mxu0 0
    %340 = vmatmul.mubr.bf16.gmra.mxu0 %v234
    %v341 = vpop.f32.mrf.mxu0
    %v342 = vadd.f32 0.0, %v341
    %v343 = vpop.f32.mrf.mxu0
    %v344 = vpop.f32.mrf.mxu0
    %v345 = vadd.f32 0.0, %v344
    %v346 = vpop.f32.mrf.mxu0
    %347 = vdwg.mxu0
    %v348 = vpack.c.bf16 %v337, %v334
    %v349 = vpack.c.bf16 %v345, %v342
    %350 = vmatprep.subr.bf16.mxu0 0
    %351 = vmatpush1.bf16.msra.mxu0 0
    %352 = vmatprep.subr.bf16.mxu0 0
    %353 = vmatpush1.bf16.msra.mxu0 0
    %354 = vmatprep.subr.bf16.mxu0 0
    %355 = vmatpush1.bf16.msra.mxu0 0
    %356 = vmatprep.subr.bf16.mxu0 0
    %357 = vmatpush1.bf16.msra.mxu0 0
    %358 = vmatprep.subr.bf16.mxu0 0
    %359 = vmatpush1.bf16.msra.mxu0 0
    %360 = vmatprep.subr.bf16.mxu0 0
    %361 = vmatpush1.bf16.msra.mxu0 0
    %362 = vmatprep.subr.bf16.mxu0 0
    %363 = vmatpush1.bf16.msra.mxu0 %v349
    %364 = vmatprep.subr.bf16.mxu0 0
    %365 = vmatpush1.bf16.msra.mxu0 %v348
    %366 = vmatprep.subr.bf16.mxu0 0
    %367 = vmatpush2.bf16.msra.mxu0 0
    %368 = vmatprep.subr.bf16.mxu0 0
    %369 = vmatpush2.bf16.msra.mxu0 0
    %370 = vmatprep.subr.bf16.mxu0 0
    %371 = vmatpush2.bf16.msra.mxu0 0
    %372 = vmatprep.subr.bf16.mxu0 0
    %373 = vmatpush2.bf16.msra.mxu0 0
    %374 = vmatprep.subr.bf16.mxu0 0
    %375 = vmatpush2.bf16.msra.mxu0 0
    %376 = vmatprep.subr.bf16.mxu0 0
    %377 = vmatpush2.bf16.msra.mxu0 0
    %378 = vmatprep.subr.bf16.mxu0 0
    %379 = vmatpush2.bf16.msra.mxu0 0
    %380 = vmatprep.subr.bf16.mxu0 0
    %381 = vmatpush2.bf16.msra.mxu0 0
    %382 = vmatprep.mubr.bf16.mxu0 0
    %383 = vmatmul.mubr.bf16.gmra.mxu0 %v175
    %v384 = vpop.f32.mrf.mxu0
    %v385 = vadd.f32 0.0, %v384
    %v386 = vpop.f32.mrf.mxu0
    %v387 = vpop.f32.mrf.mxu0
    %v388 = vadd.f32 0.0, %v387
    %v389 = vpop.f32.mrf.mxu0
    %390 = vmatprep.mubr.bf16.mxu0 0
    %391 = vmatmul.mubr.bf16.gmra.mxu0 %v178
    %v392 = vpop.f32.mrf.mxu0
    %v393 = vadd.f32 0.0, %v392
    %v394 = vpop.f32.mrf.mxu0
    %v395 = vpop.f32.mrf.mxu0
    %v396 = vadd.f32 0.0, %v395
    %v397 = vpop.f32.mrf.mxu0
    %398 = vdwg.mxu0
    %v399 = vpack.c.bf16 %v388, %v385
    %v400 = vpack.c.bf16 %v396, %v393
    %v401 = vld [vmem:[%s4] sm:$0xff]
    %v402 = vld [vmem:[%s4 + $0x8] sm:$0xff]
    %v403 = vld [vmem:[%s4 + $0x10] sm:$0xff]
    %v404 = vld [vmem:[%s4 + $0x18] sm:$0xff]
    %v405 = vld [vmem:[%s4 + $0x20] sm:$0xff]
    %v406 = vld [vmem:[%s4 + $0x28] sm:$0xff]
    %v407 = vld [vmem:[%s4 + $0x30] sm:$0xff]
    %v408 = vld [vmem:[%s4 + $0x38] sm:$0xff]
    %v409 = vld [vmem:[%s4 + $0x40] sm:$0xff]
    %v410 = vld [vmem:[%s4 + $0x48] sm:$0xff]
    %v411 = vld [vmem:[%s4 + $0x50] sm:$0xff]
    %v412 = vld [vmem:[%s4 + $0x58] sm:$0xff]
    %v413 = vld [vmem:[%s4 + $0x60] sm:$0xff]
    %v414 = vld [vmem:[%s4 + $0x68] sm:$0xff]
    %v415 = vld [vmem:[%s4 + $0x70] sm:$0xff]
    %v416 = vld [vmem:[%s4 + $0x78] sm:$0xff]
    %v417 = vld [vmem:[%s4 + $0x80] sm:$0xff]
    %v418 = vld [vmem:[%s4 + $0x88] sm:$0xff]
    %v419 = vld [vmem:[%s4 + $0x90] sm:$0xff]
    %v420 = vld [vmem:[%s4 + $0x98] sm:$0xff]
    %v421 = vld [vmem:[%s4 + $0xa0] sm:$0xff]
    %v422 = vld [vmem:[%s4 + $0xa8] sm:$0xff]
    %v423 = vld [vmem:[%s4 + $0xb0] sm:$0xff]
    %v424 = vld [vmem:[%s4 + $0xb8] sm:$0xff]
    %v425 = vld [vmem:[%s4 + $0xc0] sm:$0xff]
    %v426 = vld [vmem:[%s4 + $0xc8] sm:$0xff]
    %v427 = vld [vmem:[%s4 + $0xd0] sm:$0xff]
    %v428 = vld [vmem:[%s4 + $0xd8] sm:$0xff]
    %v429 = vld [vmem:[%s4 + $0xe0] sm:$0xff]
    %v430 = vld [vmem:[%s4 + $0xe8] sm:$0xff]
    %v431 = vld [vmem:[%s4 + $0xf0] sm:$0xff]
    %v432 = vld [vmem:[%s4 + $0xf8] sm:$0xff]
    %v433 = vlaneseq
    %v434 = vand.u32 %v433, 127
    %435 = vset.pattern.permute.xlu0 0
    %436 = vperm.xlu0 %435, %v401
    %v437 = vpop.permute.xlu0 %436
    %438 = vset.pattern.permute.xlu0 0
    %439 = vperm.xlu0 %438, %v402
    %v440 = vpop.permute.xlu0 %439
    %441 = vset.pattern.permute.xlu0 0
    %442 = vperm.xlu0 %441, %v403
    %v443 = vpop.permute.xlu0 %442
    %444 = vset.pattern.permute.xlu0 0
    %445 = vperm.xlu0 %444, %v404
    %v446 = vpop.permute.xlu0 %445
    %447 = vset.pattern.permute.xlu0 0
    %448 = vperm.xlu0 %447, %v405
    %v449 = vpop.permute.xlu0 %448
    %450 = vset.pattern.permute.xlu0 0
    %451 = vperm.xlu0 %450, %v406
    %v452 = vpop.permute.xlu0 %451
    %453 = vset.pattern.permute.xlu0 0
    %454 = vperm.xlu0 %453, %v407
    %v455 = vpop.permute.xlu0 %454
    %456 = vset.pattern.permute.xlu0 0
    %457 = vperm.xlu0 %456, %v408
    %v458 = vpop.permute.xlu0 %457
    %459 = vset.pattern.permute.xlu0 0
    %460 = vperm.xlu0 %459, %v409
    %v461 = vpop.permute.xlu0 %460
    %462 = vset.pattern.permute.xlu0 0
    %463 = vperm.xlu0 %462, %v410
    %v464 = vpop.permute.xlu0 %463
    %465 = vset.pattern.permute.xlu0 0
    %466 = vperm.xlu0 %465, %v411
    %v467 = vpop.permute.xlu0 %466
    %468 = vset.pattern.permute.xlu0 0
    %469 = vperm.xlu0 %468, %v412
    %v470 = vpop.permute.xlu0 %469
    %471 = vset.pattern.permute.xlu0 0
    %472 = vperm.xlu0 %471, %v413
    %v473 = vpop.permute.xlu0 %472
    %474 = vset.pattern.permute.xlu0 0
    %475 = vperm.xlu0 %474, %v414
    %v476 = vpop.permute.xlu0 %475
    %477 = vset.pattern.permute.xlu0 0
    %478 = vperm.xlu0 %477, %v415
    %v479 = vpop.permute.xlu0 %478
    %480 = vset.pattern.permute.xlu0 0
    %481 = vperm.xlu0 %480, %v416
    %v482 = vpop.permute.xlu0 %481
    %483 = vset.pattern.permute.xlu0 0
    %484 = vperm.xlu0 %483, %v417
    %v485 = vpop.permute.xlu0 %484
    %486 = vset.pattern.permute.xlu0 0
    %487 = vperm.xlu0 %486, %v418
    %v488 = vpop.permute.xlu0 %487
    %489 = vset.pattern.permute.xlu0 0
    %490 = vperm.xlu0 %489, %v419
    %v491 = vpop.permute.xlu0 %490
    %492 = vset.pattern.permute.xlu0 0
    %493 = vperm.xlu0 %492, %v420
    %v494 = vpop.permute.xlu0 %493
    %495 = vset.pattern.permute.xlu0 0
    %496 = vperm.xlu0 %495, %v421
    %v497 = vpop.permute.xlu0 %496
    %498 = vset.pattern.permute.xlu0 0
    %499 = vperm.xlu0 %498, %v422
    %v500 = vpop.permute.xlu0 %499
    %501 = vset.pattern.permute.xlu0 0
    %502 = vperm.xlu0 %501, %v423
    %v503 = vpop.permute.xlu0 %502
    %504 = vset.pattern.permute.xlu0 0
    %505 = vperm.xlu0 %504, %v424
    %v506 = vpop.permute.xlu0 %505
    %507 = vset.pattern.permute.xlu0 0
    %508 = vperm.xlu0 %507, %v425
    %v509 = vpop.permute.xlu0 %508
    %510 = vset.pattern.permute.xlu0 0
    %511 = vperm.xlu0 %510, %v426
    %v512 = vpop.permute.xlu0 %511
    %513 = vset.pattern.permute.xlu0 0
    %514 = vperm.xlu0 %513, %v427
    %v515 = vpop.permute.xlu0 %514
    %516 = vset.pattern.permute.xlu0 0
    %517 = vperm.xlu0 %516, %v428
    %v518 = vpop.permute.xlu0 %517
    %519 = vset.pattern.permute.xlu0 0
    %520 = vperm.xlu0 %519, %v429
    %v521 = vpop.permute.xlu0 %520
    %522 = vset.pattern.permute.xlu0 0
    %523 = vperm.xlu0 %522, %v430
    %v524 = vpop.permute.xlu0 %523
    %525 = vset.pattern.permute.xlu0 0
    %526 = vperm.xlu0 %525, %v431
    %v527 = vpop.permute.xlu0 %526
    %528 = vset.pattern.permute.xlu0 0
    %529 = vperm.xlu0 %528, %v432
    %v530 = vpop.permute.xlu0 %529
    %vm531 = vcmp.eq.s32.totalorder %v434, %v437
    %vm532 = vcmp.eq.s32.totalorder %v434, %v440
    %vm533 = vcmp.eq.s32.totalorder %v434, %v443
    %vm534 = vcmp.eq.s32.totalorder %v434, %v446
    %vm535 = vcmp.eq.s32.totalorder %v434, %v449
    %vm536 = vcmp.eq.s32.totalorder %v434, %v452
    %vm537 = vcmp.eq.s32.totalorder %v434, %v455
    %vm538 = vcmp.eq.s32.totalorder %v434, %v458
    %vm539 = vcmp.eq.s32.totalorder %v434, %v461
    %vm540 = vcmp.eq.s32.totalorder %v434, %v464
    %vm541 = vcmp.eq.s32.totalorder %v434, %v467
    %vm542 = vcmp.eq.s32.totalorder %v434, %v470
    %vm543 = vcmp.eq.s32.totalorder %v434, %v473
    %vm544 = vcmp.eq.s32.totalorder %v434, %v476
    %vm545 = vcmp.eq.s32.totalorder %v434, %v479
    %vm546 = vcmp.eq.s32.totalorder %v434, %v482
    %vm547 = vcmp.eq.s32.totalorder %v434, %v485
    %vm548 = vcmp.eq.s32.totalorder %v434, %v488
    %vm549 = vcmp.eq.s32.totalorder %v434, %v491
    %vm550 = vcmp.eq.s32.totalorder %v434, %v494
    %vm551 = vcmp.eq.s32.totalorder %v434, %v497
    %vm552 = vcmp.eq.s32.totalorder %v434, %v500
    %vm553 = vcmp.eq.s32.totalorder %v434, %v503
    %vm554 = vcmp.eq.s32.totalorder %v434, %v506
    %vm555 = vcmp.eq.s32.totalorder %v434, %v509
    %vm556 = vcmp.eq.s32.totalorder %v434, %v512
    %vm557 = vcmp.eq.s32.totalorder %v434, %v515
    %vm558 = vcmp.eq.s32.totalorder %v434, %v518
    %vm559 = vcmp.eq.s32.totalorder %v434, %v521
    %vm560 = vcmp.eq.s32.totalorder %v434, %v524
    %vm561 = vcmp.eq.s32.totalorder %v434, %v527
    %vm562 = vcmp.eq.s32.totalorder %v434, %v530
    %v563 = vsel %vm531, 1, 0
    %v564 = vsel %vm532, 1, 0
    %v565 = vsel %vm533, 1, 0
    %v566 = vsel %vm534, 1, 0
    %v567 = vsel %vm535, 1, 0
    %v568 = vsel %vm536, 1, 0
    %v569 = vsel %vm537, 1, 0
    %v570 = vsel %vm538, 1, 0
    %v571 = vsel %vm539, 1, 0
    %v572 = vsel %vm540, 1, 0
    %v573 = vsel %vm541, 1, 0
    %v574 = vsel %vm542, 1, 0
    %v575 = vsel %vm543, 1, 0
    %v576 = vsel %vm544, 1, 0
    %v577 = vsel %vm545, 1, 0
    %v578 = vsel %vm546, 1, 0
    %v579 = vsel %vm547, 1, 0
    %v580 = vsel %vm548, 1, 0
    %v581 = vsel %vm549, 1, 0
    %v582 = vsel %vm550, 1, 0
    %v583 = vsel %vm551, 1, 0
    %v584 = vsel %vm552, 1, 0
    %v585 = vsel %vm553, 1, 0
    %v586 = vsel %vm554, 1, 0
    %v587 = vsel %vm555, 1, 0
    %v588 = vsel %vm556, 1, 0
    %v589 = vsel %vm557, 1, 0
    %v590 = vsel %vm558, 1, 0
    %v591 = vsel %vm559, 1, 0
    %v592 = vsel %vm560, 1, 0
    %v593 = vsel %vm561, 1, 0
    %v594 = vsel %vm562, 1, 0
    %v595 = vcvt.s32.f32 %v563
    %v596 = vcvt.s32.f32 %v564
    %v597 = vcvt.s32.f32 %v565
    %v598 = vcvt.s32.f32 %v566
    %v599 = vcvt.s32.f32 %v567
    %v600 = vcvt.s32.f32 %v568
    %v601 = vcvt.s32.f32 %v569
    %v602 = vcvt.s32.f32 %v570
    %v603 = vcvt.s32.f32 %v571
    %v604 = vcvt.s32.f32 %v572
    %v605 = vcvt.s32.f32 %v573
    %v606 = vcvt.s32.f32 %v574
    %v607 = vcvt.s32.f32 %v575
    %v608 = vcvt.s32.f32 %v576
    %v609 = vcvt.s32.f32 %v577
    %v610 = vcvt.s32.f32 %v578
    %v611 = vcvt.s32.f32 %v579
    %v612 = vcvt.s32.f32 %v580
    %v613 = vcvt.s32.f32 %v581
    %v614 = vcvt.s32.f32 %v582
    %v615 = vcvt.s32.f32 %v583
    %v616 = vcvt.s32.f32 %v584
    %v617 = vcvt.s32.f32 %v585
    %v618 = vcvt.s32.f32 %v586
    %v619 = vcvt.s32.f32 %v587
    %v620 = vcvt.s32.f32 %v588
    %v621 = vcvt.s32.f32 %v589
    %v622 = vcvt.s32.f32 %v590
    %v623 = vcvt.s32.f32 %v591
    %v624 = vcvt.s32.f32 %v592
    %v625 = vcvt.s32.f32 %v593
    %v626 = vcvt.s32.f32 %v594
    %v627 = vpack.c.bf16 %v596, %v595
    %v628 = vpack.c.bf16 %v598, %v597
    %v629 = vpack.c.bf16 %v600, %v599
    %v630 = vpack.c.bf16 %v602, %v601
    %v631 = vpack.c.bf16 %v604, %v603
    %v632 = vpack.c.bf16 %v606, %v605
    %v633 = vpack.c.bf16 %v608, %v607
    %v634 = vpack.c.bf16 %v610, %v609
    %v635 = vpack.c.bf16 %v612, %v611
    %v636 = vpack.c.bf16 %v614, %v613
    %v637 = vpack.c.bf16 %v616, %v615
    %v638 = vpack.c.bf16 %v618, %v617
    %v639 = vpack.c.bf16 %v620, %v619
    %v640 = vpack.c.bf16 %v622, %v621
    %v641 = vpack.c.bf16 %v624, %v623
    %v642 = vpack.c.bf16 %v626, %v625
    %v644 = vsel %vm173, %v627, 0
    %v647 = vsel %vm173, %v628, 0
    %v650 = vsel %vm173, %v629, 0
    %v653 = vsel %vm173, %v630, 0
    %v656 = vsel %vm173, %v631, 0
    %v659 = vsel %vm173, %v632, 0
    %v662 = vsel %vm173, %v633, 0
    %v665 = vsel %vm173, %v634, 0
    %v668 = vsel %vm173, %v635, 0
    %v671 = vsel %vm173, %v636, 0
    %v674 = vsel %vm173, %v637, 0
    %v677 = vsel %vm173, %v638, 0
    %v680 = vsel %vm173, %v639, 0
    %v683 = vsel %vm173, %v640, 0
    %v686 = vsel %vm173, %v641, 0
    %v689 = vsel %vm173, %v642, 0
    %691 = vmatprep.subr.bf16.mxu0 0
    %692 = vmatpush1.bf16.msra.mxu0 0
    %693 = vmatprep.subr.bf16.mxu0 0
    %694 = vmatpush1.bf16.msra.mxu0 0
    %695 = vmatprep.subr.bf16.mxu0 0
    %696 = vmatpush1.bf16.msra.mxu0 0
    %697 = vmatprep.subr.bf16.mxu0 0
    %698 = vmatpush1.bf16.msra.mxu0 0
    %699 = vmatprep.subr.bf16.mxu0 0
    %700 = vmatpush1.bf16.msra.mxu0 0
    %701 = vmatprep.subr.bf16.mxu0 0
    %702 = vmatpush1.bf16.msra.mxu0 0
    %703 = vmatprep.subr.bf16.mxu0 0
    %704 = vmatpush1.bf16.msra.mxu0 %v400
    %705 = vmatprep.subr.bf16.mxu0 0
    %706 = vmatpush1.bf16.msra.mxu0 %v399
    %707 = vmatprep.subr.bf16.mxu0 0
    %708 = vmatpush2.bf16.msra.mxu0 0
    %709 = vmatprep.subr.bf16.mxu0 0
    %710 = vmatpush2.bf16.msra.mxu0 0
    %711 = vmatprep.subr.bf16.mxu0 0
    %712 = vmatpush2.bf16.msra.mxu0 0
    %713 = vmatprep.subr.bf16.mxu0 0
    %714 = vmatpush2.bf16.msra.mxu0 0
    %715 = vmatprep.subr.bf16.mxu0 0
    %716 = vmatpush2.bf16.msra.mxu0 0
    %717 = vmatprep.subr.bf16.mxu0 0
    %718 = vmatpush2.bf16.msra.mxu0 0
    %719 = vmatprep.subr.bf16.mxu0 0
    %720 = vmatpush2.bf16.msra.mxu0 0
    %721 = vmatprep.subr.bf16.mxu0 0
    %722 = vmatpush2.bf16.msra.mxu0 0
    %723 = vmatprep.mubr.bf16.mxu0 0
    %724 = vmatmul.mubr.bf16.gmra.mxu0 %v644
    %v725 = vpop.f32.mrf.mxu0
    %v726 = vadd.f32 0.0, %v725
    %v727 = vpop.f32.mrf.mxu0
    %v728 = vpop.f32.mrf.mxu0
    %v729 = vadd.f32 0.0, %v728
    %v730 = vpop.f32.mrf.mxu0
    %731 = vmatprep.mubr.bf16.mxu0 0
    %732 = vmatmul.mubr.bf16.gmra.mxu0 %v647
    %v733 = vpop.f32.mrf.mxu0
    %v734 = vadd.f32 0.0, %v733
    %v735 = vpop.f32.mrf.mxu0
    %v736 = vpop.f32.mrf.mxu0
    %v737 = vadd.f32 0.0, %v736
    %v738 = vpop.f32.mrf.mxu0
    %739 = vmatprep.mubr.bf16.mxu0 0
    %740 = vmatmul.mubr.bf16.gmra.mxu0 %v650
    %v741 = vpop.f32.mrf.mxu0
    %v742 = vadd.f32 0.0, %v741
    %v743 = vpop.f32.mrf.mxu0
    %v744 = vpop.f32.mrf.mxu0
    %v745 = vadd.f32 0.0, %v744
    %v746 = vpop.f32.mrf.mxu0
    %747 = vmatprep.mubr.bf16.mxu0 0
    %748 = vmatmul.mubr.bf16.gmra.mxu0 %v653
    %v749 = vpop.f32.mrf.mxu0
    %v750 = vadd.f32 0.0, %v749
    %v751 = vpop.f32.mrf.mxu0
    %v752 = vpop.f32.mrf.mxu0
    %v753 = vadd.f32 0.0, %v752
    %v754 = vpop.f32.mrf.mxu0
    %755 = vmatprep.mubr.bf16.mxu0 0
    %756 = vmatmul.mubr.bf16.gmra.mxu0 %v656
    %v757 = vpop.f32.mrf.mxu0
    %v758 = vadd.f32 0.0, %v757
    %v759 = vpop.f32.mrf.mxu0
    %v760 = vpop.f32.mrf.mxu0
    %v761 = vadd.f32 0.0, %v760
    %v762 = vpop.f32.mrf.mxu0
    %763 = vmatprep.mubr.bf16.mxu0 0
    %764 = vmatmul.mubr.bf16.gmra.mxu0 %v659
    %v765 = vpop.f32.mrf.mxu0
    %v766 = vadd.f32 0.0, %v765
    %v767 = vpop.f32.mrf.mxu0
    %v768 = vpop.f32.mrf.mxu0
    %v769 = vadd.f32 0.0, %v768
    %v770 = vpop.f32.mrf.mxu0
    %771 = vmatprep.mubr.bf16.mxu0 0
    %772 = vmatmul.mubr.bf16.gmra.mxu0 %v662
    %v773 = vpop.f32.mrf.mxu0
    %v774 = vadd.f32 0.0, %v773
    %v775 = vpop.f32.mrf.mxu0
    %v776 = vpop.f32.mrf.mxu0
    %v777 = vadd.f32 0.0, %v776
    %v778 = vpop.f32.mrf.mxu0
    %779 = vmatprep.mubr.bf16.mxu0 0
    %780 = vmatmul.mubr.bf16.gmra.mxu0 %v665
    %v781 = vpop.f32.mrf.mxu0
    %v782 = vadd.f32 0.0, %v781
    %v783 = vpop.f32.mrf.mxu0
    %v784 = vpop.f32.mrf.mxu0
    %v785 = vadd.f32 0.0, %v784
    %v786 = vpop.f32.mrf.mxu0
    %787 = vmatprep.mubr.bf16.mxu0 0
    %788 = vmatmul.mubr.bf16.gmra.mxu0 %v668
    %v789 = vpop.f32.mrf.mxu0
    %v790 = vadd.f32 0.0, %v789
    %v791 = vpop.f32.mrf.mxu0
    %v792 = vpop.f32.mrf.mxu0
    %v793 = vadd.f32 0.0, %v792
    %v794 = vpop.f32.mrf.mxu0
    %795 = vmatprep.mubr.bf16.mxu0 0
    %796 = vmatmul.mubr.bf16.gmra.mxu0 %v671
    %v797 = vpop.f32.mrf.mxu0
    %v798 = vadd.f32 0.0, %v797
    %v799 = vpop.f32.mrf.mxu0
    %v800 = vpop.f32.mrf.mxu0
    %v801 = vadd.f32 0.0, %v800
    %v802 = vpop.f32.mrf.mxu0
    %803 = vmatprep.mubr.bf16.mxu0 0
    %804 = vmatmul.mubr.bf16.gmra.mxu0 %v674
    %v805 = vpop.f32.mrf.mxu0
    %v806 = vadd.f32 0.0, %v805
    %v807 = vpop.f32.mrf.mxu0
    %v808 = vpop.f32.mrf.mxu0
    %v809 = vadd.f32 0.0, %v808
    %v810 = vpop.f32.mrf.mxu0
    %811 = vmatprep.mubr.bf16.mxu0 0
    %812 = vmatmul.mubr.bf16.gmra.mxu0 %v677
    %v813 = vpop.f32.mrf.mxu0
    %v814 = vadd.f32 0.0, %v813
    %v815 = vpop.f32.mrf.mxu0
    %v816 = vpop.f32.mrf.mxu0
    %v817 = vadd.f32 0.0, %v816
    %v818 = vpop.f32.mrf.mxu0
    %819 = vmatprep.mubr.bf16.mxu0 0
    %820 = vmatmul.mubr.bf16.gmra.mxu0 %v680
    %v821 = vpop.f32.mrf.mxu0
    %v822 = vadd.f32 0.0, %v821
    %v823 = vpop.f32.mrf.mxu0
    %v824 = vpop.f32.mrf.mxu0
    %v825 = vadd.f32 0.0, %v824
    %v826 = vpop.f32.mrf.mxu0
    %827 = vmatprep.mubr.bf16.mxu0 0
    %828 = vmatmul.mubr.bf16.gmra.mxu0 %v683
    %v829 = vpop.f32.mrf.mxu0
    %v830 = vadd.f32 0.0, %v829
    %v831 = vpop.f32.mrf.mxu0
    %v832 = vpop.f32.mrf.mxu0
    %v833 = vadd.f32 0.0, %v832
    %v834 = vpop.f32.mrf.mxu0
    %835 = vmatprep.mubr.bf16.mxu0 0
    %836 = vmatmul.mubr.bf16.gmra.mxu0 %v686
    %v837 = vpop.f32.mrf.mxu0
    %v838 = vadd.f32 0.0, %v837
    %v839 = vpop.f32.mrf.mxu0
    %v840 = vpop.f32.mrf.mxu0
    %v841 = vadd.f32 0.0, %v840
    %v842 = vpop.f32.mrf.mxu0
    %843 = vmatprep.mubr.bf16.mxu0 0
    %844 = vmatmul.mubr.bf16.gmra.mxu0 %v689
    %v845 = vpop.f32.mrf.mxu0
    %v846 = vadd.f32 0.0, %v845
    %v847 = vpop.f32.mrf.mxu0
    %v848 = vpop.f32.mrf.mxu0
    %v849 = vadd.f32 0.0, %v848
    %v850 = vpop.f32.mrf.mxu0
    %851 = vdwg.mxu0
    %v852 = vmul.f32 %v726, %v790
    %v853 = vmul.f32 %v729, %v793
    %v854 = vmul.f32 %v734, %v798
    %v855 = vmul.f32 %v737, %v801
    %v856 = vmul.f32 %v742, %v806
    %v857 = vmul.f32 %v745, %v809
    %v858 = vmul.f32 %v750, %v814
    %v859 = vmul.f32 %v753, %v817
    %v860 = vmul.f32 %v758, %v822
    %v861 = vmul.f32 %v761, %v825
    %v862 = vmul.f32 %v766, %v830
    %v863 = vmul.f32 %v769, %v833
    %v864 = vmul.f32 %v774, %v838
    %v865 = vmul.f32 %v777, %v841
    %v866 = vmul.f32 %v782, %v846
    %v867 = vmul.f32 %v785, %v849
    %868 = vadd.xlane.f32.xlu0 %v852
    %v869 = vpop.xlane.xlu0 %868
    %870 = vadd.xlane.f32.xlu0 %v853
    %v871 = vpop.xlane.xlu0 %870
    %872 = vadd.xlane.f32.xlu0 %v854
    %v873 = vpop.xlane.xlu0 %872
    %874 = vadd.xlane.f32.xlu0 %v855
    %v875 = vpop.xlane.xlu0 %874
    %876 = vadd.xlane.f32.xlu0 %v856
    %v877 = vpop.xlane.xlu0 %876
    %878 = vadd.xlane.f32.xlu0 %v857
    %v879 = vpop.xlane.xlu0 %878
    %880 = vadd.xlane.f32.xlu0 %v858
    %v881 = vpop.xlane.xlu0 %880
    %882 = vadd.xlane.f32.xlu0 %v859
    %v883 = vpop.xlane.xlu0 %882
    %884 = vadd.xlane.f32.xlu0 %v860
    %v885 = vpop.xlane.xlu0 %884
    %886 = vadd.xlane.f32.xlu0 %v861
    %v887 = vpop.xlane.xlu0 %886
    %888 = vadd.xlane.f32.xlu0 %v862
    %v889 = vpop.xlane.xlu0 %888
    %890 = vadd.xlane.f32.xlu0 %v863
    %v891 = vpop.xlane.xlu0 %890
    %892 = vadd.xlane.f32.xlu0 %v864
    %v893 = vpop.xlane.xlu0 %892
    %894 = vadd.xlane.f32.xlu0 %v865
    %v895 = vpop.xlane.xlu0 %894
    %896 = vadd.xlane.f32.xlu0 %v866
    %v897 = vpop.xlane.xlu0 %896
    %898 = vadd.xlane.f32.xlu0 %v867
    %v899 = vpop.xlane.xlu0 %898
    %v900 = vmax.f32 %v869, 0.0
    %v901 = vmax.f32 %v871, 0.0
    %v902 = vmax.f32 %v873, 0.0
    %v903 = vmax.f32 %v875, 0.0
    %v904 = vmax.f32 %v877, 0.0
    %v905 = vmax.f32 %v879, 0.0
    %v906 = vmax.f32 %v881, 0.0
    %v907 = vmax.f32 %v883, 0.0
    %v908 = vmax.f32 %v885, 0.0
    %v909 = vmax.f32 %v887, 0.0
    %v910 = vmax.f32 %v889, 0.0
    %v911 = vmax.f32 %v891, 0.0
    %v912 = vmax.f32 %v893, 0.0
    %v913 = vmax.f32 %v895, 0.0
    %v914 = vmax.f32 %v897, 0.0
    %v915 = vmax.f32 %v899, 0.0
    %v916 = vand.u32 2147483647, %v869
    %v917 = vand.u32 2147483647, %v871
    %v918 = vand.u32 2147483647, %v873
    %v919 = vand.u32 2147483647, %v875
    %v920 = vand.u32 2147483647, %v877
    %v921 = vand.u32 2147483647, %v879
    %v922 = vand.u32 2147483647, %v881
    %v923 = vand.u32 2147483647, %v883
    %v924 = vand.u32 2147483647, %v885
    %v925 = vand.u32 2147483647, %v887
    %v926 = vand.u32 2147483647, %v889
    %v927 = vand.u32 2147483647, %v891
    %v928 = vand.u32 2147483647, %v893
    %v929 = vand.u32 2147483647, %v895
    %v930 = vand.u32 2147483647, %v897
    %v931 = vand.u32 2147483647, %v899
    %v932 = vsub.f32 0.0, %v916
    %v933 = vsub.f32 0.0, %v917
    %v934 = vsub.f32 0.0, %v918
    %v935 = vsub.f32 0.0, %v919
    %v936 = vsub.f32 0.0, %v920
    %v937 = vsub.f32 0.0, %v921
    %v938 = vsub.f32 0.0, %v922
    %v939 = vsub.f32 0.0, %v923
    %v940 = vsub.f32 0.0, %v924
    %v941 = vsub.f32 0.0, %v925
    %v942 = vsub.f32 0.0, %v926
    %v943 = vsub.f32 0.0, %v927
    %v944 = vsub.f32 0.0, %v928
    %v945 = vsub.f32 0.0, %v929
    %v946 = vsub.f32 0.0, %v930
    %v947 = vsub.f32 0.0, %v931
    %v948 = vmul.f32 %v932, 1.442695
    %v949 = vpow.pop %v948
    %v950 = vmul.f32 %v933, 1.442695
    %v951 = vpow.pop %v950
    %v952 = vmul.f32 %v934, 1.442695
    %v953 = vpow.pop %v952
    %v954 = vmul.f32 %v935, 1.442695
    %v955 = vpow.pop %v954
    %v956 = vmul.f32 %v936, 1.442695
    %v957 = vpow.pop %v956
    %v958 = vmul.f32 %v937, 1.442695
    %v959 = vpow.pop %v958
    %v960 = vmul.f32 %v938, 1.442695
    %v961 = vpow.pop %v960
    %v962 = vmul.f32 %v939, 1.442695
    %v963 = vpow.pop %v962
    %v964 = vmul.f32 %v940, 1.442695
    %v965 = vpow.pop %v964
    %v966 = vmul.f32 %v941, 1.442695
    %v967 = vpow.pop %v966
    %v968 = vmul.f32 %v942, 1.442695
    %v969 = vpow.pop %v968
    %v970 = vmul.f32 %v943, 1.442695
    %v971 = vpow.pop %v970
    %v972 = vmul.f32 %v944, 1.442695
    %v973 = vpow.pop %v972
    %v974 = vmul.f32 %v945, 1.442695
    %v975 = vpow.pop %v974
    %v976 = vmul.f32 %v946, 1.442695
    %v977 = vpow.pop %v976
    %v978 = vmul.f32 %v947, 1.442695
    %v979 = vpow.pop %v978
    %v980 = vadd.f32 %v949, 1.0
    %v981 = vadd.f32 %v951, 1.0
    %v982 = vadd.f32 %v953, 1.0
    %v983 = vadd.f32 %v955, 1.0
    %v984 = vadd.f32 %v957, 1.0
    %v985 = vadd.f32 %v959, 1.0
    %v986 = vadd.f32 %v961, 1.0
    %v987 = vadd.f32 %v963, 1.0
    %v988 = vadd.f32 %v965, 1.0
    %v989 = vadd.f32 %v967, 1.0
    %v990 = vadd.f32 %v969, 1.0
    %v991 = vadd.f32 %v971, 1.0
    %v992 = vadd.f32 %v973, 1.0
    %v993 = vadd.f32 %v975, 1.0
    %v994 = vadd.f32 %v977, 1.0
    %v995 = vadd.f32 %v979, 1.0
    %v996 = vlog2.pop %v980
    %v997 = vmul.f32 %v996, 0.6931472
    %v998 = vlog2.pop %v981
    %v999 = vmul.f32 %v998, 0.6931472
    %v1000 = vlog2.pop %v982
    %v1001 = vmul.f32 %v1000, 0.6931472
    %v1002 = vlog2.pop %v983
    %v1003 = vmul.f32 %v1002, 0.6931472
    %v1004 = vlog2.pop %v984
    %v1005 = vmul.f32 %v1004, 0.6931472
    %v1006 = vlog2.pop %v985
    %v1007 = vmul.f32 %v1006, 0.6931472
    %v1008 = vlog2.pop %v986
    %v1009 = vmul.f32 %v1008, 0.6931472
    %v1010 = vlog2.pop %v987
    %v1011 = vmul.f32 %v1010, 0.6931472
    %v1012 = vlog2.pop %v988
    %v1013 = vmul.f32 %v1012, 0.6931472
    %v1014 = vlog2.pop %v989
    %v1015 = vmul.f32 %v1014, 0.6931472
    %v1016 = vlog2.pop %v990
    %v1017 = vmul.f32 %v1016, 0.6931472
    %v1018 = vlog2.pop %v991
    %v1019 = vmul.f32 %v1018, 0.6931472
    %v1020 = vlog2.pop %v992
    %v1021 = vmul.f32 %v1020, 0.6931472
    %v1022 = vlog2.pop %v993
    %v1023 = vmul.f32 %v1022, 0.6931472
    %v1024 = vlog2.pop %v994
    %v1025 = vmul.f32 %v1024, 0.6931472
    %v1026 = vlog2.pop %v995
    %v1027 = vmul.f32 %v1026, 0.6931472
    %v1028 = vadd.f32 %v900, %v997
    %v1029 = vadd.f32 %v901, %v999
    %v1030 = vadd.f32 %v902, %v1001
    %v1031 = vadd.f32 %v903, %v1003
    %v1032 = vadd.f32 %v904, %v1005
    %v1033 = vadd.f32 %v905, %v1007
    %v1034 = vadd.f32 %v906, %v1009
    %v1035 = vadd.f32 %v907, %v1011
    %v1036 = vadd.f32 %v908, %v1013
    %v1037 = vadd.f32 %v909, %v1015
    %v1038 = vadd.f32 %v910, %v1017
    %v1039 = vadd.f32 %v911, %v1019
    %v1040 = vadd.f32 %v912, %v1021
    %v1041 = vadd.f32 %v913, %v1023
    %v1042 = vadd.f32 %v914, %v1025
    %v1043 = vadd.f32 %v915, %v1027
    %v1044 = vld [vmem:[%s5] sm:$0xff]
    %v1045 = vld [vmem:[%s5 + $0x8] sm:$0xff]
    %v1046 = vld [vmem:[%s5 + $0x10] sm:$0xff]
    %v1047 = vld [vmem:[%s5 + $0x18] sm:$0xff]
    %v1048 = vld [vmem:[%s5 + $0x20] sm:$0xff]
    %v1049 = vld [vmem:[%s5 + $0x28] sm:$0xff]
    %v1050 = vld [vmem:[%s5 + $0x30] sm:$0xff]
    %v1051 = vld [vmem:[%s5 + $0x38] sm:$0xff]
    %v1052 = vld [vmem:[%s5 + $0x40] sm:$0xff]
    %v1053 = vld [vmem:[%s5 + $0x48] sm:$0xff]
    %v1054 = vld [vmem:[%s5 + $0x50] sm:$0xff]
    %v1055 = vld [vmem:[%s5 + $0x58] sm:$0xff]
    %v1056 = vld [vmem:[%s5 + $0x60] sm:$0xff]
    %v1057 = vld [vmem:[%s5 + $0x68] sm:$0xff]
    %v1058 = vld [vmem:[%s5 + $0x70] sm:$0xff]
    %v1059 = vld [vmem:[%s5 + $0x78] sm:$0xff]
    %v1060 = vmul.f32 %v1044, %v1028
    %v1061 = vmul.f32 %v1045, %v1029
    %v1062 = vmul.f32 %v1046, %v1030
    %v1063 = vmul.f32 %v1047, %v1031
    %v1064 = vmul.f32 %v1048, %v1032
    %v1065 = vmul.f32 %v1049, %v1033
    %v1066 = vmul.f32 %v1050, %v1034
    %v1067 = vmul.f32 %v1051, %v1035
    %v1068 = vmul.f32 %v1052, %v1036
    %v1069 = vmul.f32 %v1053, %v1037
    %v1070 = vmul.f32 %v1054, %v1038
    %v1071 = vmul.f32 %v1055, %v1039
    %v1072 = vmul.f32 %v1056, %v1040
    %v1073 = vmul.f32 %v1057, %v1041
    %v1074 = vmul.f32 %v1058, %v1042
    %v1075 = vmul.f32 %v1059, %v1043
    %v1076 = vld [vmem:[%s6] sm:$0xff]
    %v1077 = vld [vmem:[%s6 + $0x8] sm:$0xff]
    %v1078 = vld [vmem:[%s6 + $0x10] sm:$0xff]
    %v1079 = vld [vmem:[%s6 + $0x18] sm:$0xff]
    %v1080 = vld [vmem:[%s6 + $0x20] sm:$0xff]
    %v1081 = vld [vmem:[%s6 + $0x28] sm:$0xff]
    %v1082 = vld [vmem:[%s6 + $0x30] sm:$0xff]
    %v1083 = vld [vmem:[%s6 + $0x38] sm:$0xff]
    %v1084 = vld [vmem:[%s6 + $0x40] sm:$0xff]
    %v1085 = vld [vmem:[%s6 + $0x48] sm:$0xff]
    %v1086 = vld [vmem:[%s6 + $0x50] sm:$0xff]
    %v1087 = vld [vmem:[%s6 + $0x58] sm:$0xff]
    %v1088 = vld [vmem:[%s6 + $0x60] sm:$0xff]
    %v1089 = vld [vmem:[%s6 + $0x68] sm:$0xff]
    %v1090 = vld [vmem:[%s6 + $0x70] sm:$0xff]
    %v1091 = vld [vmem:[%s6 + $0x78] sm:$0xff]
    %v1092 = vmul.f32 %v1076, %v869
    %v1093 = vmul.f32 %v1077, %v871
    %v1094 = vmul.f32 %v1078, %v873
    %v1095 = vmul.f32 %v1079, %v875
    %v1096 = vmul.f32 %v1080, %v877
    %v1097 = vmul.f32 %v1081, %v879
    %v1098 = vmul.f32 %v1082, %v881
    %v1099 = vmul.f32 %v1083, %v883
    %v1100 = vmul.f32 %v1084, %v885
    %v1101 = vmul.f32 %v1085, %v887
    %v1102 = vmul.f32 %v1086, %v889
    %v1103 = vmul.f32 %v1087, %v891
    %v1104 = vmul.f32 %v1088, %v893
    %v1105 = vmul.f32 %v1089, %v895
    %v1106 = vmul.f32 %v1090, %v897
    %v1107 = vmul.f32 %v1091, %v899
    %v1108 = vadd.f32 %v1060, %v1092
    %v1109 = vadd.f32 %v1061, %v1093
    %v1110 = vadd.f32 %v1062, %v1094
    %v1111 = vadd.f32 %v1063, %v1095
    %v1112 = vadd.f32 %v1064, %v1096
    %v1113 = vadd.f32 %v1065, %v1097
    %v1114 = vadd.f32 %v1066, %v1098
    %v1115 = vadd.f32 %v1067, %v1099
    %v1116 = vadd.f32 %v1068, %v1100
    %v1117 = vadd.f32 %v1069, %v1101
    %v1118 = vadd.f32 %v1070, %v1102
    %v1119 = vadd.f32 %v1071, %v1103
    %v1120 = vadd.f32 %v1072, %v1104
    %v1121 = vadd.f32 %v1073, %v1105
    %v1122 = vadd.f32 %v1074, %v1106
    %v1123 = vadd.f32 %v1075, %v1107
    %vm1124 = vcmask 7168
    %v1125 = vsel %vm1124, %v1108, 0.0
    %v1126 = vsel %vm1124, %v1109, 0.0
    %v1127 = vadd.f32 %v1125, %v1126
    %v1128 = vsel %vm1124, %v1110, 0.0
    %v1129 = vadd.f32 %v1127, %v1128
    %v1130 = vsel %vm1124, %v1111, 0.0
    %v1131 = vadd.f32 %v1129, %v1130
    %v1132 = vsel %vm1124, %v1112, 0.0
    %v1133 = vadd.f32 %v1131, %v1132
    %v1134 = vsel %vm1124, %v1113, 0.0
    %v1135 = vadd.f32 %v1133, %v1134
    %v1136 = vsel %vm1124, %v1114, 0.0
    %v1137 = vadd.f32 %v1135, %v1136
    %v1138 = vsel %vm1124, %v1115, 0.0
    %v1139 = vadd.f32 %v1137, %v1138
    %v1140 = vsel %vm1124, %v1116, 0.0
    %v1141 = vadd.f32 %v1139, %v1140
    %v1142 = vsel %vm1124, %v1117, 0.0
    %v1143 = vadd.f32 %v1141, %v1142
    %v1144 = vsel %vm1124, %v1118, 0.0
    %v1145 = vadd.f32 %v1143, %v1144
    %v1146 = vsel %vm1124, %v1119, 0.0
    %v1147 = vadd.f32 %v1145, %v1146
    %v1148 = vsel %vm1124, %v1120, 0.0
    %v1149 = vadd.f32 %v1147, %v1148
    %v1150 = vsel %vm1124, %v1121, 0.0
    %v1151 = vadd.f32 %v1149, %v1150
    %v1152 = vsel %vm1124, %v1122, 0.0
    %v1153 = vadd.f32 %v1151, %v1152
    %v1154 = vsel %vm1124, %v1123, 0.0
    %v1155 = vadd.f32 %v1153, %v1154
    %1156 = vadd.xlane.f32.xlu0 %v1155
    %v1157 = vpop.xlane.xlu0 %1156
    %v1158 = vrot.slane %v1157, 4
    %v1159 = vadd.f32 %v1157, %v1158
    %v1160 = vrot.slane %v1159, 2
    %v1161 = vadd.f32 %v1159, %v1160
    %v1162 = vrot.slane %v1161, 1
    %v1163 = vadd.f32 %v1161, %v1162
    %s1164 = vtos %v1163
    %s1165 = scalar_lea.smem [#allocation2], 0
    %1166 = sst [smem:[%s1165]] %s1164
    // Predicated region
    $region30: #{gae_forward.1} parent=1 // pred_check
      _
    $region31: #{gae_forward.1} parent=1 // pred_check_branch
      %1168 = sbr.rel (0) target = $region33
    $region32: #{gae_forward.1} parent=1 // pred_region
      %s1170 = ssub.s32 16, 16
      %1171 = vsyncadd [#allocation3], %s1170
      %1174 = dma.smem_to_hbm [#allocation2], 16, %s7, [#allocation3]
    $region33: #{gae_forward.1} parent=1 // pred_fallthru
      _
    // Predicated region
    $region34: #{gae_forward.1} parent=1 // pred_check
      _
    $region35: #{gae_forward.1} parent=1 // pred_check_branch
      %1176 = sbr.rel (0) target = $region37
    $region36: #{gae_forward.1} parent=1 // pred_region
      %1177 = dma.done [#allocation3], 16
    $region37: #{gae_forward.1} parent=1 // pred_fallthru
      _
    %1178 = sfence
    %1179 = vsyncpa [#allocation3], 1

</llo_original>
